<compile_context>
chip_gen: v5e
topology: v5e:2x2
jax: 0.10.0
libtpu: 0.0.40
codegen_flags: <defaults>
</compile_context>

<pallas_src>
import math
import functools

import jax
import jax.numpy as jnp
from jax.experimental import pallas as pl
from jax.experimental.pallas import tpu as pltpu


def _heads_per_group(num_heads, hidden_dim, d2, target_lanes=256):
    """Heads per MXU group.

    Groups heads so that each group's V/output width (g*hd) fills one MXU
    tile (128 lanes on v5e, 256 on v6e/v7x).  Removes the H-fold MAC
    inflation of the fully dense block-diagonal factoring while keeping every
    matmul lane-dense.  Falls back to the dense single-group form when the
    whole head dimension already fits a couple of MXU tiles.
    """
    if num_heads * hidden_dim <= target_lanes and num_heads * d2 <= 2 * target_lanes:
        return num_heads
    cap = max(1, target_lanes // max(hidden_dim, 1))
    best = 1
    for g in range(1, num_heads + 1):
        if num_heads % g == 0 and g <= cap:
            best = g
    return best


def _absolute_attention_kernel(x_ref, wq_ref, wv_ref, wo_ref, mones_ref,
                               t_ref, tt_ref, mask_ref, ln_g_ref, ln_b_ref,
                               out_ref, comb_ref, *,
                               batch_block, seq_len, num_groups,
                               group_hd, group_d2):
    """One batch block (Bt batch elements) per grid step.

    x_ref     : (Bt, L, dim)      f32   (cast to bf16 here; no wrapper cast pass)
    wq_ref    : (dim, Dh)         bf16  Dh = H*hd
    wv_ref    : (dim, Dh)         bf16
    wo_ref    : (Dh, dim)         bf16
    mones_ref : (ghd, ghd)        bf16  within-group block-diag ones (per-head sum)
    t_ref     : (L, HD2)          bf16  flattened time encoding T
    tt_ref    : (HD2, L)          bf16  T^T pre-scaled by 1/hd (batch-invariant)
    mask_ref  : (gD2, ghd)        bf16  within-group block-diag head-matching mask
    ln_g_ref  : (1, dim)          f32
    ln_b_ref  : (1, dim)          f32
    out_ref   : (Bt, L, dim)
    comb_ref  : (Bt*L, Dh)        f32   VMEM scratch
    """
    rows = batch_block * seq_len
    dim = x_ref.shape[-1]

    # Row-wise work runs once over the stacked (Bt*L, dim) rows.
    x = x_ref[...].reshape(rows, dim).astype(jnp.bfloat16)

    q_lin = jnp.dot(x, wq_ref[...], preferred_element_type=jnp.float32)     # (rows, Dh)
    q_sig = jax.nn.sigmoid(q_lin).astype(jnp.bfloat16)
    v_bf = jnp.dot(x, wv_ref[...],
                   preferred_element_type=jnp.float32).astype(jnp.bfloat16)  # (rows, Dh)

    # Factored attention, head-grouped:
    #   comb = q_sum * ( T_g @ blockdiag( (T_g^T / hd) @ V_g ) )   per group
    # (1/hd pre-folded into tt_ref; mask kills cross-head terms in the group).
    for gi in range(num_groups):
        c0 = gi * group_hd                       # column offset into (rows, Dh)
        t0 = gi * group_d2                       # column offset into the time encoding
        # Per-head sigmoid-sum broadcast across that head's lanes: one dense
        # lane-aligned matmul, no cross-lane XLU reduce.
        q_sum_g = jnp.dot(q_sig[:, c0:c0 + group_hd], mones_ref[...],
                          preferred_element_type=jnp.float32)               # (rows, ghd)
        t_g = t_ref[:, t0:t0 + group_d2]                                    # (L, gD2)
        tt_g = tt_ref[t0:t0 + group_d2, :]                                  # (gD2, L)
        for b in range(batch_block):
            r0 = b * seq_len
            v_bg = v_bf[r0:r0 + seq_len, c0:c0 + group_hd]                  # (L, ghd)
            g = jnp.dot(tt_g, v_bg, preferred_element_type=jnp.float32)     # (gD2, ghd)
            g_bf = g.astype(jnp.bfloat16) * mask_ref[...]                   # bf16 0/1 mask
            ts = jnp.dot(t_g, g_bf, preferred_element_type=jnp.float32)     # (L, ghd)
            comb_ref[r0:r0 + seq_len, c0:c0 + group_hd] = (
                q_sum_g[r0:r0 + seq_len] * ts)

    # Output projection + single-pass LayerNorm (f32 statistics).
    out_lin = jnp.dot(comb_ref[...].astype(jnp.bfloat16), wo_ref[...],
                      preferred_element_type=jnp.float32)                   # (rows, dim)
    mean = jnp.mean(out_lin, axis=-1, keepdims=True)
    mean_sq = jnp.mean(out_lin * out_lin, axis=-1, keepdims=True)
    var = mean_sq - mean * mean
    normed = (out_lin - mean) * jax.lax.rsqrt(var + 1e-5)
    y = normed * ln_g_ref[...] + ln_b_ref[...]
    out_ref[...] = y.reshape(batch_block, seq_len, dim).astype(out_ref.dtype)


def _build_time_encoding(L, time_angle, head_time_delta, hidden_dim):
    """time[l, h, :] = [cos+sin, cos-sin] / sqrt(hd)   (plain-JAX glue, f32)."""
    pos = jnp.arange(L, dtype=time_angle.dtype)                             # (L,)
    angles = (pos[:, None, None] + head_time_delta[None, :, None]) \
        * time_angle[None, :, :]                                            # (L, H, Td)
    cos, sin = jnp.cos(angles), jnp.sin(angles)
    time = jnp.concatenate([cos + sin, cos - sin], axis=-1)                 # (L, H, 2Td)
    return time / math.sqrt(hidden_dim)


def absolute_attention_forward(x, attention_mask, params, *,
                               batch_block=None, group_lane_target=256,
                               out_dtype=jnp.float32):
    """x: (B, L, dim) float32; attention_mask feeds only the dead K branch."""
    del attention_mask
    B, L, dim = x.shape
    H = params["num_heads"]
    hd = params["hidden_dim"]
    Td = params["time_dim"]
    D2 = 2 * Td
    Dh = H * hd
    HD2 = H * D2

    # ---- batch blocking (amortize per-grid-step pipeline overhead) -----------
    if batch_block is None:
        batch_block = 1
        for cand in (4, 3, 2):
            if B % cand == 0:
                batch_block = cand
                break
    assert B % batch_block == 0, "batch_block must divide the batch size"

    # ---- head grouping to the MXU lane width (128 v5e / 256 v6e,v7x) ---------
    hpg = _heads_per_group(H, hd, D2, target_lanes=group_lane_target)
    num_groups = H // hpg
    ghd = hpg * hd
    gd2 = hpg * D2

    # ---- batch-invariant precompute (plain JAX, runs once per call) ----------
    # TODO(synk): if this layer is called repeatedly, cache these bf16 casts /
    #             encodings at the caller instead of re-deriving them per call.
    time = _build_time_encoding(L, params["time_angle"],
                                params["head_time_delta"], hd)              # (L, H, D2)
    tflat = time.reshape(L, HD2)
    t_bf = tflat.astype(jnp.bfloat16)                                       # T
    tt_bf = (tflat.T * (1.0 / float(hd))).astype(jnp.bfloat16)              # T^T, 1/hd folded in
    # within-group block-diagonal head-matching mask for T_g^T @ V_g
    mask = (jnp.arange(gd2)[:, None] // D2
            == jnp.arange(ghd)[None, :] // hd).astype(jnp.bfloat16)         # (gD2, ghd)
    # within-group block-diagonal ones: per-head sum broadcast across lanes
    mones = (jnp.arange(ghd)[:, None] // hd
             == jnp.arange(ghd)[None, :] // hd).astype(jnp.bfloat16)        # (ghd, ghd)

    wq = params["wq"].astype(jnp.bfloat16)
    wv = params["wv"].astype(jnp.bfloat16)
    wo = params["wo"].astype(jnp.bfloat16)
    ln_g = params["ln_gamma"].reshape(1, dim).astype(jnp.float32)
    ln_b = params["ln_beta"].reshape(1, dim).astype(jnp.float32)

    kernel = functools.partial(
        _absolute_attention_kernel,
        batch_block=batch_block, seq_len=L, num_groups=num_groups,
        group_hd=ghd, group_d2=gd2)

    # Batch-invariant operands: constant index_map -> single buffer (the
    # default second buffer is pure VMEM waste since they are never re-fetched).
    const = dict(pipeline_mode=pl.Buffered(1))

    out = pl.pallas_call(
        kernel,
        out_shape=jax.ShapeDtypeStruct((B, L, dim), out_dtype),
        grid_spec=pltpu.PrefetchScalarGridSpec(
            num_scalar_prefetch=0,
            grid=(B // batch_block,),
            in_specs=[
                pl.BlockSpec((batch_block, L, dim), lambda i: (i, 0, 0)),   # x (f32)
                pl.BlockSpec((dim, Dh), lambda i: (0, 0), **const),         # Wq
                pl.BlockSpec((dim, Dh), lambda i: (0, 0), **const),         # Wv
                pl.BlockSpec((Dh, dim), lambda i: (0, 0), **const),         # Wo
                pl.BlockSpec((ghd, ghd), lambda i: (0, 0), **const),        # mones (per group)
                pl.BlockSpec((L, HD2), lambda i: (0, 0), **const),          # T
                pl.BlockSpec((HD2, L), lambda i: (0, 0), **const),          # T^T / hd
                pl.BlockSpec((gd2, ghd), lambda i: (0, 0), **const),        # mask (per group)
                pl.BlockSpec((1, dim), lambda i: (0, 0), **const),          # ln gamma
                pl.BlockSpec((1, dim), lambda i: (0, 0), **const),          # ln beta
            ],
            out_specs=pl.BlockSpec((batch_block, L, dim), lambda i: (i, 0, 0)),
            scratch_shapes=[pltpu.VMEM((batch_block * L, Dh), jnp.float32)],
        ),
        compiler_params=pltpu.CompilerParams(
            dimension_semantics=("parallel",),
            # above the 16/32 MiB scoped defaults, below v7x's 64 MiB physical
            # budget; can be raised toward ~96 MiB on v5e/v6e for larger L.
            vmem_limit_bytes=48 * 1024 * 1024),
    )(x.astype(jnp.float32), wq, wv, wo, mones, t_bf, tt_bf, mask, ln_g, ln_b)
    return out


def reference_forward(x, attention_mask, params):
    """Pure-JAX f32 transcription of the PyTorch forward (eval mode)."""
    del attention_mask
    B, L, dim = x.shape
    H, hd = params["num_heads"], params["hidden_dim"]
    q = jax.nn.sigmoid(x @ params["wq"]).reshape(B, L, H, hd) / hd
    time = _build_time_encoding(L, params["time_angle"],
                                params["head_time_delta"], hd)              # (L, H, D2)
    q = q.sum(-1)[..., None] * time[None]                                   # (B, L, H, D2)
    k_time = time                                                           # module bug: reuses time_angles
    attention = jnp.einsum("blhd,thd->blth", q, k_time)
    v = (x @ params["wv"]).reshape(B, L, H, hd)
    comb = jnp.einsum("blth,bthd->blhd", attention, v)
    out = comb.reshape(B, L, H * hd) @ params["wo"]
    mean = out.mean(-1, keepdims=True)
    var = ((out - mean) ** 2).mean(-1, keepdims=True)
    return (out - mean) / jnp.sqrt(var + 1e-5) * params["ln_gamma"] + params["ln_beta"]


def init_params(key, dim, num_heads, time_dim):
    hd = dim // num_heads
    ks = jax.random.split(key, 5)
    bound = 1.0 / math.sqrt(dim)
    return {
        "num_heads": num_heads,
        "hidden_dim": hd,
        "time_dim": time_dim,
        # nn.Parameter(torch.rand(...)) ~ U(0, 1)
        "time_angle": jax.random.uniform(ks[0], (num_heads, time_dim), jnp.float32),
        "head_time_delta": jax.random.uniform(ks[1], (num_heads,), jnp.float32),
        # Linear weights stored as (in, out); biases are zero in the module
        "wq": jax.random.uniform(ks[2], (dim, num_heads * hd), jnp.float32,
                                 minval=-bound, maxval=bound),
        "wv": jax.random.uniform(ks[3], (dim, num_heads * hd), jnp.float32,
                                 minval=-bound, maxval=bound),
        "wo": jax.random.uniform(ks[4], (num_heads * hd, dim), jnp.float32,
                                 minval=-1.0 / math.sqrt(num_heads * hd),
                                 maxval=1.0 / math.sqrt(num_heads * hd)),
        "ln_gamma": jnp.ones((dim,), jnp.float32),
        "ln_beta": jnp.zeros((dim,), jnp.float32),
    }


if __name__ == "__main__":
    # Small shapes consistent with the module: dim % num_heads == 0.
    B, L, DIM, HEADS, TIME_DIM = 2, 8, 32, 4, 16

    root = jax.random.PRNGKey(0)
    k_p, k_x = jax.random.split(root)
    params = init_params(k_p, DIM, HEADS, TIME_DIM)

    x = jax.random.normal(k_x, (B, L, DIM), jnp.float32)
    attention_mask = jnp.ones((B, L), jnp.float32)

    out = absolute_attention_forward(x, attention_mask, params)
    out = jax.block_until_ready(out)

    ref = jax.block_until_ready(reference_forward(x, attention_mask, params))
    assert out.shape == (B, L, DIM)
    # Tolerance covers bf16 matmul-operand quantization (f32 accumulation);
    # the f32 reference and the kernel agree to ~1e-2.
    assert jnp.allclose(out, ref, atol=5e-2, rtol=5e-2), \
        f"max abs err {jnp.max(jnp.abs(out - ref))}"

    print("KERNEL_OK")
</pallas_src>

<mosaic_0001>
module attributes {stable_mosaic.version = 11 : i64} {
  func.func @_absolute_attention_kernel(%arg0: i32, %arg1: memref<2x8x32xf32, #tpu.memory_space<vmem>>, %arg2: memref<32x32xbf16, #tpu.memory_space<vmem>>, %arg3: memref<32x32xbf16, #tpu.memory_space<vmem>>, %arg4: memref<32x32xbf16, #tpu.memory_space<vmem>>, %arg5: memref<32x32xbf16, #tpu.memory_space<vmem>>, %arg6: memref<8x128xbf16, #tpu.memory_space<vmem>>, %arg7: memref<128x8xbf16, #tpu.memory_space<vmem>>, %arg8: memref<128x32xbf16, #tpu.memory_space<vmem>>, %arg9: memref<1x32xf32, #tpu.memory_space<vmem>>, %arg10: memref<1x32xf32, #tpu.memory_space<vmem>>, %arg11: memref<2x8x32xf32, #tpu.memory_space<vmem>>, %arg12: memref<16x32xf32, #tpu.memory_space<vmem>>) attributes {dimension_semantics = [#tpu.dimension_semantics<parallel>], iteration_bounds = array<i64: 1>, scalar_prefetch = 0 : i64, scratch_operands = 1 : i64, tpu.core_type = #tpu.core_type<tc>, window_params = [{transform_indices = @transform_0, window_bounds = array<i64: 2, 8, 32>}, {pipeline_mode = #tpu.pipeline_mode<synchronous>, transform_indices = @transform_1, window_bounds = array<i64: 32, 32>}, {pipeline_mode = #tpu.pipeline_mode<synchronous>, transform_indices = @transform_2, window_bounds = array<i64: 32, 32>}, {pipeline_mode = #tpu.pipeline_mode<synchronous>, transform_indices = @transform_3, window_bounds = array<i64: 32, 32>}, {pipeline_mode = #tpu.pipeline_mode<synchronous>, transform_indices = @transform_4, window_bounds = array<i64: 32, 32>}, {pipeline_mode = #tpu.pipeline_mode<synchronous>, transform_indices = @transform_5, window_bounds = array<i64: 8, 128>}, {pipeline_mode = #tpu.pipeline_mode<synchronous>, transform_indices = @transform_6, window_bounds = array<i64: 128, 8>}, {pipeline_mode = #tpu.pipeline_mode<synchronous>, transform_indices = @transform_7, window_bounds = array<i64: 128, 32>}, {pipeline_mode = #tpu.pipeline_mode<synchronous>, transform_indices = @transform_8, window_bounds = array<i64: 1, 32>}, {pipeline_mode = #tpu.pipeline_mode<synchronous>, transform_indices = @transform_9, window_bounds = array<i64: 1, 32>}, {transform_indices = @transform_10, window_bounds = array<i64: 2, 8, 32>}]} {
    %c0 = arith.constant 0 : index
    %c0_0 = arith.constant 0 : index
    %c0_1 = arith.constant 0 : index
    %0 = vector.load %arg1[%c0, %c0_0, %c0_1] : memref<2x8x32xf32, #tpu.memory_space<vmem>>, vector<2x8x32xf32>
    %1 = vector.shape_cast %0 : vector<2x8x32xf32> to vector<16x32xf32>
    %2 = arith.truncf %1 : vector<16x32xf32> to vector<16x32xbf16>
    %c0_2 = arith.constant 0 : index
    %c0_3 = arith.constant 0 : index
    %3 = vector.load %arg2[%c0_2, %c0_3] : memref<32x32xbf16, #tpu.memory_space<vmem>>, vector<32x32xbf16>
    %cst = arith.constant dense<0.000000e+00> : vector<16x32xf32>
    %4 = tpu.matmul %2, %3, %cst {dimension_numbers = #tpu.dot_dimension_numbers<[1], [0], [0], [1], [0, 0, 1, 1], [], []>} : vector<16x32xbf16>, vector<32x32xbf16>, vector<16x32xf32> -> vector<16x32xf32>
    %5 = arith.negf %4 : vector<16x32xf32>
    %6 = math.exp %5 : vector<16x32xf32>
    %cst_4 = arith.constant 1.000000e+00 : f32
    %7 = vector.broadcast %cst_4 : f32 to vector<16x32xf32>
    %8 = arith.addf %7, %6 : vector<16x32xf32>
    %9 = arith.divf %7, %8 : vector<16x32xf32>
    %10 = arith.truncf %9 : vector<16x32xf32> to vector<16x32xbf16>
    %c0_5 = arith.constant 0 : index
    %c0_6 = arith.constant 0 : index
    %11 = vector.load %arg3[%c0_5, %c0_6] : memref<32x32xbf16, #tpu.memory_space<vmem>>, vector<32x32xbf16>
    %cst_7 = arith.constant dense<0.000000e+00> : vector<16x32xf32>
    %12 = tpu.matmul %2, %11, %cst_7 {dimension_numbers = #tpu.dot_dimension_numbers<[1], [0], [0], [1], [0, 0, 1, 1], [], []>} : vector<16x32xbf16>, vector<32x32xbf16>, vector<16x32xf32> -> vector<16x32xf32>
    %13 = arith.truncf %12 : vector<16x32xf32> to vector<16x32xbf16>
    %c0_8 = arith.constant 0 : index
    %c0_9 = arith.constant 0 : index
    %14 = vector.load %arg5[%c0_8, %c0_9] : memref<32x32xbf16, #tpu.memory_space<vmem>>, vector<32x32xbf16>
    %cst_10 = arith.constant dense<0.000000e+00> : vector<16x32xf32>
    %15 = tpu.matmul %10, %14, %cst_10 {dimension_numbers = #tpu.dot_dimension_numbers<[1], [0], [0], [1], [0, 0, 1, 1], [], []>} : vector<16x32xbf16>, vector<32x32xbf16>, vector<16x32xf32> -> vector<16x32xf32>
    %c0_11 = arith.constant 0 : index
    %c0_12 = arith.constant 0 : index
    %16 = vector.load %arg6[%c0_11, %c0_12] : memref<8x128xbf16, #tpu.memory_space<vmem>>, vector<8x128xbf16>
    %c0_13 = arith.constant 0 : index
    %c0_14 = arith.constant 0 : index
    %17 = vector.load %arg7[%c0_13, %c0_14] : memref<128x8xbf16, #tpu.memory_space<vmem>>, vector<128x8xbf16>
    %18 = vector.extract_strided_slice %13 {offsets = [0, 0], sizes = [8, 32], strides = [1, 1]} : vector<16x32xbf16> to vector<8x32xbf16>
    %cst_15 = arith.constant dense<0.000000e+00> : vector<128x32xf32>
    %19 = tpu.matmul %17, %18, %cst_15 {dimension_numbers = #tpu.dot_dimension_numbers<[1], [0], [0], [1], [0, 0, 1, 1], [], []>} : vector<128x8xbf16>, vector<8x32xbf16>, vector<128x32xf32> -> vector<128x32xf32>
    %20 = arith.truncf %19 : vector<128x32xf32> to vector<128x32xbf16>
    %c0_16 = arith.constant 0 : index
    %c0_17 = arith.constant 0 : index
    %21 = vector.load %arg8[%c0_16, %c0_17] : memref<128x32xbf16, #tpu.memory_space<vmem>>, vector<128x32xbf16>
    %22 = arith.mulf %20, %21 : vector<128x32xbf16>
    %cst_18 = arith.constant dense<0.000000e+00> : vector<8x32xf32>
    %23 = tpu.matmul %16, %22, %cst_18 {dimension_numbers = #tpu.dot_dimension_numbers<[1], [0], [0], [1], [0, 0, 1, 1], [], []>} : vector<8x128xbf16>, vector<128x32xbf16>, vector<8x32xf32> -> vector<8x32xf32>
    %24 = vector.extract_strided_slice %15 {offsets = [0, 0], sizes = [8, 32], strides = [1, 1]} : vector<16x32xf32> to vector<8x32xf32>
    %25 = arith.mulf %24, %23 : vector<8x32xf32>
    %c0_19 = arith.constant 0 : index
    %c0_20 = arith.constant 0 : index
    %26 = vector.load %arg12[%c0_19, %c0_20] : memref<16x32xf32, #tpu.memory_space<vmem>>, vector<8x32xf32>
    tpu.vector_store %arg12[%c0_19, %c0_20], %25 {strides = array<i32>} : memref<16x32xf32, #tpu.memory_space<vmem>>, vector<8x32xf32>,
    %27 = vector.extract_strided_slice %13 {offsets = [8, 0], sizes = [8, 32], strides = [1, 1]} : vector<16x32xbf16> to vector<8x32xbf16>
    %cst_21 = arith.constant dense<0.000000e+00> : vector<128x32xf32>
    %28 = tpu.matmul %17, %27, %cst_21 {dimension_numbers = #tpu.dot_dimension_numbers<[1], [0], [0], [1], [0, 0, 1, 1], [], []>} : vector<128x8xbf16>, vector<8x32xbf16>, vector<128x32xf32> -> vector<128x32xf32>
    %29 = arith.truncf %28 : vector<128x32xf32> to vector<128x32xbf16>
    %c0_22 = arith.constant 0 : index
    %c0_23 = arith.constant 0 : index
    %30 = vector.load %arg8[%c0_22, %c0_23] : memref<128x32xbf16, #tpu.memory_space<vmem>>, vector<128x32xbf16>
    %31 = arith.mulf %29, %30 : vector<128x32xbf16>
    %cst_24 = arith.constant dense<0.000000e+00> : vector<8x32xf32>
    %32 = tpu.matmul %16, %31, %cst_24 {dimension_numbers = #tpu.dot_dimension_numbers<[1], [0], [0], [1], [0, 0, 1, 1], [], []>} : vector<8x128xbf16>, vector<128x32xbf16>, vector<8x32xf32> -> vector<8x32xf32>
    %33 = vector.extract_strided_slice %15 {offsets = [8, 0], sizes = [8, 32], strides = [1, 1]} : vector<16x32xf32> to vector<8x32xf32>
    %34 = arith.mulf %33, %32 : vector<8x32xf32>
    %c8 = arith.constant 8 : index
    %c0_25 = arith.constant 0 : index
    %35 = vector.load %arg12[%c8, %c0_25] : memref<16x32xf32, #tpu.memory_space<vmem>>, vector<8x32xf32>
    tpu.vector_store %arg12[%c8, %c0_25], %34 {strides = array<i32>} : memref<16x32xf32, #tpu.memory_space<vmem>>, vector<8x32xf32>,
    %c0_26 = arith.constant 0 : index
    %c0_27 = arith.constant 0 : index
    %36 = vector.load %arg12[%c0_26, %c0_27] : memref<16x32xf32, #tpu.memory_space<vmem>>, vector<16x32xf32>
    %37 = arith.truncf %36 : vector<16x32xf32> to vector<16x32xbf16>
    %c0_28 = arith.constant 0 : index
    %c0_29 = arith.constant 0 : index
    %38 = vector.load %arg4[%c0_28, %c0_29] : memref<32x32xbf16, #tpu.memory_space<vmem>>, vector<32x32xbf16>
    %cst_30 = arith.constant dense<0.000000e+00> : vector<16x32xf32>
    %39 = tpu.matmul %37, %38, %cst_30 {dimension_numbers = #tpu.dot_dimension_numbers<[1], [0], [0], [1], [0, 0, 1, 1], [], []>} : vector<16x32xbf16>, vector<32x32xbf16>, vector<16x32xf32> -> vector<16x32xf32>
    %cst_31 = arith.constant dense<0.000000e+00> : vector<16xf32>
    %40 = vector.multi_reduction <add>, %39, %cst_31 [1] : vector<16x32xf32> to vector<16xf32>
    %41 = vector.shape_cast %40 : vector<16xf32> to vector<16x1xf32>
    %cst_32 = arith.constant 3.200000e+01 : f32
    %42 = vector.broadcast %cst_32 : f32 to vector<16x1xf32>
    %43 = arith.divf %41, %42 : vector<16x1xf32>
    %44 = arith.mulf %39, %39 : vector<16x32xf32>
    %cst_33 = arith.constant dense<0.000000e+00> : vector<16xf32>
    %45 = vector.multi_reduction <add>, %44, %cst_33 [1] : vector<16x32xf32> to vector<16xf32>
    %46 = vector.shape_cast %45 : vector<16xf32> to vector<16x1xf32>
    %cst_34 = arith.constant 3.200000e+01 : f32
    %47 = vector.broadcast %cst_34 : f32 to vector<16x1xf32>
    %48 = arith.divf %46, %47 : vector<16x1xf32>
    %49 = arith.mulf %43, %43 : vector<16x1xf32>
    %50 = arith.subf %48, %49 : vector<16x1xf32>
    %51 = vector.broadcast %43 : vector<16x1xf32> to vector<16x32xf32>
    %52 = arith.subf %39, %51 : vector<16x32xf32>
    %cst_35 = arith.constant 9.99999974E-6 : f32
    %53 = vector.broadcast %cst_35 : f32 to vector<16x1xf32>
    %54 = arith.addf %50, %53 : vector<16x1xf32>
    %55 = math.rsqrt %54 : vector<16x1xf32>
    %56 = vector.broadcast %55 : vector<16x1xf32> to vector<16x32xf32>
    %57 = arith.mulf %52, %56 : vector<16x32xf32>
    %c0_36 = arith.constant 0 : index
    %c0_37 = arith.constant 0 : index
    %58 = vector.load %arg9[%c0_36, %c0_37] : memref<1x32xf32, #tpu.memory_space<vmem>>, vector<1x32xf32>
    %59 = vector.broadcast %58 : vector<1x32xf32> to vector<16x32xf32>
    %60 = arith.mulf %57, %59 : vector<16x32xf32>
    %c0_38 = arith.constant 0 : index
    %c0_39 = arith.constant 0 : index
    %61 = vector.load %arg10[%c0_38, %c0_39] : memref<1x32xf32, #tpu.memory_space<vmem>>, vector<1x32xf32>
    %62 = vector.broadcast %61 : vector<1x32xf32> to vector<16x32xf32>
    %63 = arith.addf %60, %62 : vector<16x32xf32>
    %64 = vector.shape_cast %63 : vector<16x32xf32> to vector<2x8x32xf32>
    %c0_40 = arith.constant 0 : index
    %c0_41 = arith.constant 0 : index
    %c0_42 = arith.constant 0 : index
    %65 = vector.load %arg11[%c0_40, %c0_41, %c0_42] : memref<2x8x32xf32, #tpu.memory_space<vmem>>, vector<2x8x32xf32>
    tpu.vector_store %arg11[%c0_40, %c0_41, %c0_42], %64 {strides = array<i32>} : memref<2x8x32xf32, #tpu.memory_space<vmem>>, vector<2x8x32xf32>,
    return
  }
  func.func @transform_0(%arg0: i32) -> (i32, i32, i32) {
    %c0_i32 = arith.constant 0 : i32
    %c0_i32_0 = arith.constant 0 : i32
    %c0_i32_1 = arith.constant 0 : i32
    return %arg0, %c0_i32, %c0_i32_0 : i32, i32, i32
  }
  func.func @transform_1(%arg0: i32) -> (i32, i32) {
    %c0_i32 = arith.constant 0 : i32
    %c0_i32_0 = arith.constant 0 : i32
    %c0_i32_1 = arith.constant 0 : i32
    return %c0_i32, %c0_i32_0 : i32, i32
  }
  func.func @transform_2(%arg0: i32) -> (i32, i32) {
    %c0_i32 = arith.constant 0 : i32
    %c0_i32_0 = arith.constant 0 : i32
    %c0_i32_1 = arith.constant 0 : i32
    return %c0_i32, %c0_i32_0 : i32, i32
  }
  func.func @transform_3(%arg0: i32) -> (i32, i32) {
    %c0_i32 = arith.constant 0 : i32
    %c0_i32_0 = arith.constant 0 : i32
    %c0_i32_1 = arith.constant 0 : i32
    return %c0_i32, %c0_i32_0 : i32, i32
  }
  func.func @transform_4(%arg0: i32) -> (i32, i32) {
    %c0_i32 = arith.constant 0 : i32
    %c0_i32_0 = arith.constant 0 : i32
    %c0_i32_1 = arith.constant 0 : i32
    return %c0_i32, %c0_i32_0 : i32, i32
  }
  func.func @transform_5(%arg0: i32) -> (i32, i32) {
    %c0_i32 = arith.constant 0 : i32
    %c0_i32_0 = arith.constant 0 : i32
    %c0_i32_1 = arith.constant 0 : i32
    return %c0_i32, %c0_i32_0 : i32, i32
  }
  func.func @transform_6(%arg0: i32) -> (i32, i32) {
    %c0_i32 = arith.constant 0 : i32
    %c0_i32_0 = arith.constant 0 : i32
    %c0_i32_1 = arith.constant 0 : i32
    return %c0_i32, %c0_i32_0 : i32, i32
  }
  func.func @transform_7(%arg0: i32) -> (i32, i32) {
    %c0_i32 = arith.constant 0 : i32
    %c0_i32_0 = arith.constant 0 : i32
    %c0_i32_1 = arith.constant 0 : i32
    return %c0_i32, %c0_i32_0 : i32, i32
  }
  func.func @transform_8(%arg0: i32) -> (i32, i32) {
    %c0_i32 = arith.constant 0 : i32
    %c0_i32_0 = arith.constant 0 : i32
    %c0_i32_1 = arith.constant 0 : i32
    return %c0_i32, %c0_i32_0 : i32, i32
  }
  func.func @transform_9(%arg0: i32) -> (i32, i32) {
    %c0_i32 = arith.constant 0 : i32
    %c0_i32_0 = arith.constant 0 : i32
    %c0_i32_1 = arith.constant 0 : i32
    return %c0_i32, %c0_i32_0 : i32, i32
  }
  func.func @transform_10(%arg0: i32) -> (i32, i32, i32) {
    %c0_i32 = arith.constant 0 : i32
    %c0_i32_0 = arith.constant 0 : i32
    %c0_i32_1 = arith.constant 0 : i32
    return %arg0, %c0_i32, %c0_i32_0 : i32, i32, i32
  }
}

</mosaic_0001>

<llo_original>
// kernel: tpu_custom_call.1
$region0: #{tpu_custom_call.1}
  #allocation0 [shape = 'u32[]', space=smem, size = 0x4, offset = 0x4, fixed_abs, tag = 'smem constant byte address 0x4 - core index']
  #allocation1 [shape = 'u32[72,128]{1,0:T(1,128)}', space=vmem, size = 0x9000, scoped, tag = 'internal scratch']
  #allocation2 [shape = 'f32[16,32]{1,0:T(8,128)}', space=vmem, size = 0x2000, scoped, tag = 'scratch operand']
  %s0 = inlined_call_operand.vmem [shape: f32[2,8,32], index: 0, kind: input, shape index: {}]
  %s1 = inlined_call_operand.vmem [shape: bf16[32,32], index: 1, kind: input, shape index: {}]
  %s2 = inlined_call_operand.vmem [shape: bf16[32,32], index: 2, kind: input, shape index: {}]
  %s3 = inlined_call_operand.vmem [shape: bf16[32,32], index: 3, kind: input, shape index: {}]
  %s4 = inlined_call_operand.vmem [shape: bf16[32,32], index: 4, kind: input, shape index: {}]
  %s5 = inlined_call_operand.vmem [shape: bf16[8,128], index: 5, kind: input, shape index: {}]
  %s6 = inlined_call_operand.vmem [shape: bf16[128,8], index: 6, kind: input, shape index: {}]
  %s7 = inlined_call_operand.vmem [shape: bf16[128,32], index: 7, kind: input, shape index: {}]
  %s8 = inlined_call_operand.vmem [shape: f32[1,32], index: 8, kind: input, shape index: {}]
  %s9 = inlined_call_operand.vmem [shape: f32[1,32], index: 9, kind: input, shape index: {}]
  %s10 = inlined_call_operand.hbm [shape: f32[2,8,32], index: 10, kind: output, shape index: {}]
  %s11 = sld [smem:[#allocation0]]
  $region50: #{tpu_custom_call.1} parent=0
    _
  %s13 = ssub.s32 1, %s11
  %s14 = scalar_select 0, %s13, %s11
  $region1: #{tpu_custom_call.1} parent=0
    #allocation3 [shape = 'u8[8192]{0}', space=vmem, size = 0x2000, scoped, tag = 'output window, operand 0, single buffered']
    #allocation4 [shape = 's32[1]{0}', space=sflag, size = 0x4, scoped, tag = 'scoped memory for tpu_custom_call.1']
    %15 = vsyncpa [#allocation4], 0
    // Predicated region
    $region2: #{tpu_custom_call.1} parent=1 // pred_check
      _
    $region3: #{tpu_custom_call.1} parent=1 // pred_check_branch
      %17 = sbr.rel (0) target = $region5
    $region4: #{tpu_custom_call.1} parent=1 // pred_region
      _
    $region5: #{tpu_custom_call.1} parent=1 // pred_fallthru
      _
    // Predicated region
    $region6: #{tpu_custom_call.1} parent=1 // pred_check
      _
    $region7: #{tpu_custom_call.1} parent=1 // pred_check_branch
      %19 = sbr.rel (0) target = $region9
    $region8: #{tpu_custom_call.1} parent=1 // pred_region
      _
    $region9: #{tpu_custom_call.1} parent=1 // pred_fallthru
      _
    // Predicated region
    $region10: #{tpu_custom_call.1} parent=1 // pred_check
      _
    $region11: #{tpu_custom_call.1} parent=1 // pred_check_branch
      %21 = sbr.rel (0) target = $region13
    $region12: #{tpu_custom_call.1} parent=1 // pred_region
      _
    $region13: #{tpu_custom_call.1} parent=1 // pred_fallthru
      _
    // Predicated region
    $region14: #{tpu_custom_call.1} parent=1 // pred_check
      _
    $region15: #{tpu_custom_call.1} parent=1 // pred_check_branch
      %23 = sbr.rel (0) target = $region17
    $region16: #{tpu_custom_call.1} parent=1 // pred_region
      _
    $region17: #{tpu_custom_call.1} parent=1 // pred_fallthru
      _
    // Predicated region
    $region18: #{tpu_custom_call.1} parent=1 // pred_check
      _
    $region19: #{tpu_custom_call.1} parent=1 // pred_check_branch
      %25 = sbr.rel (0) target = $region21
    $region20: #{tpu_custom_call.1} parent=1 // pred_region
      _
    $region21: #{tpu_custom_call.1} parent=1 // pred_fallthru
      _
    // Predicated region
    $region22: #{tpu_custom_call.1} parent=1 // pred_check
      _
    $region23: #{tpu_custom_call.1} parent=1 // pred_check_branch
      %27 = sbr.rel (0) target = $region25
    $region24: #{tpu_custom_call.1} parent=1 // pred_region
      _
    $region25: #{tpu_custom_call.1} parent=1 // pred_fallthru
      _
    // Predicated region
    $region26: #{tpu_custom_call.1} parent=1 // pred_check
      _
    $region27: #{tpu_custom_call.1} parent=1 // pred_check_branch
      %29 = sbr.rel (0) target = $region29
    $region28: #{tpu_custom_call.1} parent=1 // pred_region
      _
    $region29: #{tpu_custom_call.1} parent=1 // pred_fallthru
      _
    // Predicated region
    $region30: #{tpu_custom_call.1} parent=1 // pred_check
      _
    $region31: #{tpu_custom_call.1} parent=1 // pred_check_branch
      %31 = sbr.rel (0) target = $region33
    $region32: #{tpu_custom_call.1} parent=1 // pred_region
      _
    $region33: #{tpu_custom_call.1} parent=1 // pred_fallthru
      _
    // Predicated region
    $region34: #{tpu_custom_call.1} parent=1 // pred_check
      _
    $region35: #{tpu_custom_call.1} parent=1 // pred_check_branch
      %33 = sbr.rel (0) target = $region37
    $region36: #{tpu_custom_call.1} parent=1 // pred_region
      _
    $region37: #{tpu_custom_call.1} parent=1 // pred_fallthru
      _
    // Predicated region
    $region38: #{tpu_custom_call.1} parent=1 // pred_check
      _
    $region39: #{tpu_custom_call.1} parent=1 // pred_check_branch
      %35 = sbr.rel (0) target = $region41
    $region40: #{tpu_custom_call.1} parent=1 // pred_region
      _
    $region41: #{tpu_custom_call.1} parent=1 // pred_fallthru
      _
    %v37 = vld [vmem:[%s0] sm:$0xff]
    %v38 = vld [vmem:[%s0 + $0x8] sm:$0xff]
    %v39 = vpack.c.bf16 %v38, %v37
    %v40 = vld [vmem:[%s1] sm:$0xf]
    %v41 = vld [vmem:[%s1 + $0x4] sm:$0xf]
    %v42 = vld [vmem:[%s1 + $0x8] sm:$0xf]
    %v43 = vld [vmem:[%s1 + $0xc] sm:$0xf]
    %v48 = vunpack.c.l.b16 %v40
    %v49 = vunpack.c.l.b16 %v41
    %v50 = vunpack.c.l.b16 %v42
    %v51 = vunpack.c.l.b16 %v43
    %v52 = vpack.c.b16 %v49, %v48
    %v53 = vpack.c.b16 %v51, %v50
    %vm56 = vcmask 261120
    %v58 = vsel %vm56, %v39, 0
    %60 = vmatpush.bf16.msra.mxu0 0
    %61 = vmatpush.bf16.msra.mxu0 0
    %62 = vmatpush.bf16.msra.mxu0 0
    %63 = vmatpush.bf16.msra.mxu0 0
    %64 = vmatpush.bf16.msra.mxu0 0
    %65 = vmatpush.bf16.msra.mxu0 0
    %66 = vmatpush.bf16.msra.mxu0 %v53
    %67 = vmatpush.bf16.msra.mxu0 %v52
    %68 = vmatmul.bf16.gmra.mxu0 %v58
    %v69 = vpop.f32.mrf.mxu0
    %v70 = vadd.f32 0.0, %v69
    %v71 = vpop.f32.mrf.mxu0
    %v72 = vadd.f32 0.0, %v71
    %73 = vdwg.mxu0
    %v74 = vxor.u32 %v70, 2147483648
    %v75 = vxor.u32 %v72, 2147483648
    %v76 = vmul.f32 %v74, 1.442695
    %v77 = vpow.pop %v76
    %v78 = vmul.f32 %v75, 1.442695
    %v79 = vpow.pop %v78
    %v80 = vadd.f32 %v77, 1.0
    %v81 = vadd.f32 %v79, 1.0
    %v82 = vrcp.pop %v80
    %v83 = vmul.f32 %v80, %v82
    %v84 = vsub.f32 1.0, %v83
    %v85 = vmul.f32 %v82, %v84
    %v86 = vadd.f32 %v82, %v85
    %vm87 = vweird.f32 %v80
    %vm88 = vweird.f32 %v82
    %vm89 = vmor %vm87, %vm88
    %v90 = vsel %vm89, %v82, %v86
    %v91 = vand.u32 2147483647, %v80
    %vm92 = vcmp.eq.f32.partialorder %v91, 8.507059e+37
    %v93 = vand.u32 %v80, 2147483648
    %v94 = vor.u32 1.1754944e-38, %v93
    %v95 = vsel %vm92, %v94, %v90
    %v96 = vmul.f32 1.0, %v95
    %v97 = vrcp.pop %v81
    %v98 = vmul.f32 %v81, %v97
    %v99 = vsub.f32 1.0, %v98
    %v100 = vmul.f32 %v97, %v99
    %v101 = vadd.f32 %v97, %v100
    %vm102 = vweird.f32 %v81
    %vm103 = vweird.f32 %v97
    %vm104 = vmor %vm102, %vm103
    %v105 = vsel %vm104, %v97, %v101
    %v106 = vand.u32 2147483647, %v81
    %vm107 = vcmp.eq.f32.partialorder %v106, 8.507059e+37
    %v108 = vand.u32 %v81, 2147483648
    %v109 = vor.u32 1.1754944e-38, %v108
    %v110 = vsel %vm107, %v109, %v105
    %v111 = vmul.f32 1.0, %v110
    %v112 = vpack.c.bf16 %v111, %v96
    %v113 = vld [vmem:[%s2] sm:$0xf]
    %v114 = vld [vmem:[%s2 + $0x4] sm:$0xf]
    %v115 = vld [vmem:[%s2 + $0x8] sm:$0xf]
    %v116 = vld [vmem:[%s2 + $0xc] sm:$0xf]
    %v121 = vunpack.c.l.b16 %v113
    %v122 = vunpack.c.l.b16 %v114
    %v123 = vunpack.c.l.b16 %v115
    %v124 = vunpack.c.l.b16 %v116
    %v125 = vpack.c.b16 %v122, %v121
    %v126 = vpack.c.b16 %v124, %v123
    %129 = vmatpush.bf16.msra.mxu0 0
    %130 = vmatpush.bf16.msra.mxu0 0
    %131 = vmatpush.bf16.msra.mxu0 0
    %132 = vmatpush.bf16.msra.mxu0 0
    %133 = vmatpush.bf16.msra.mxu0 0
    %134 = vmatpush.bf16.msra.mxu0 0
    %135 = vmatpush.bf16.msra.mxu0 %v126
    %136 = vmatpush.bf16.msra.mxu0 %v125
    %137 = vmatmul.bf16.gmra.mxu0 %v58
    %v138 = vpop.f32.mrf.mxu0
    %v139 = vadd.f32 0.0, %v138
    %v140 = vpop.f32.mrf.mxu0
    %v141 = vadd.f32 0.0, %v140
    %142 = vdwg.mxu0
    %v143 = vpack.c.bf16 %v139, %v139
    %v144 = vpack.c.bf16 %v141, %v141
    %v145 = vld [vmem:[%s4] sm:$0xf]
    %v146 = vld [vmem:[%s4 + $0x4] sm:$0xf]
    %v147 = vld [vmem:[%s4 + $0x8] sm:$0xf]
    %v148 = vld [vmem:[%s4 + $0xc] sm:$0xf]
    %v153 = vunpack.c.l.b16 %v145
    %v154 = vunpack.c.l.b16 %v146
    %v155 = vunpack.c.l.b16 %v147
    %v156 = vunpack.c.l.b16 %v148
    %v157 = vpack.c.b16 %v154, %v153
    %v158 = vpack.c.b16 %v156, %v155
    %v162 = vsel %vm56, %v112, 0
    %164 = vmatpush.bf16.msra.mxu0 0
    %165 = vmatpush.bf16.msra.mxu0 0
    %166 = vmatpush.bf16.msra.mxu0 0
    %167 = vmatpush.bf16.msra.mxu0 0
    %168 = vmatpush.bf16.msra.mxu0 0
    %169 = vmatpush.bf16.msra.mxu0 0
    %170 = vmatpush.bf16.msra.mxu0 %v158
    %171 = vmatpush.bf16.msra.mxu0 %v157
    %172 = vmatmul.bf16.gmra.mxu0 %v162
    %v173 = vpop.f32.mrf.mxu0
    %v174 = vadd.f32 0.0, %v173
    %v175 = vpop.f32.mrf.mxu0
    %v176 = vadd.f32 0.0, %v175
    %177 = vdwg.mxu0
    %v178 = vld [vmem:[%s5] sm:$0xf]
    %v179 = vld [vmem:[%s6] sm:$0xf]
    %v180 = vld [vmem:[%s6 + $0x4] sm:$0xf]
    %v181 = vld [vmem:[%s6 + $0x8] sm:$0xf]
    %v182 = vld [vmem:[%s6 + $0xc] sm:$0xf]
    %v183 = vld [vmem:[%s6 + $0x10] sm:$0xf]
    %v184 = vld [vmem:[%s6 + $0x14] sm:$0xf]
    %v185 = vld [vmem:[%s6 + $0x18] sm:$0xf]
    %v186 = vld [vmem:[%s6 + $0x1c] sm:$0xf]
    %v187 = vld [vmem:[%s6 + $0x20] sm:$0xf]
    %v188 = vld [vmem:[%s6 + $0x24] sm:$0xf]
    %v189 = vld [vmem:[%s6 + $0x28] sm:$0xf]
    %v190 = vld [vmem:[%s6 + $0x2c] sm:$0xf]
    %v191 = vld [vmem:[%s6 + $0x30] sm:$0xf]
    %v192 = vld [vmem:[%s6 + $0x34] sm:$0xf]
    %v193 = vld [vmem:[%s6 + $0x38] sm:$0xf]
    %v194 = vld [vmem:[%s6 + $0x3c] sm:$0xf]
    %v211 = vunpack.c.l.b16 %v179
    %v212 = vunpack.c.l.b16 %v180
    %v213 = vunpack.c.l.b16 %v181
    %v214 = vunpack.c.l.b16 %v182
    %v215 = vunpack.c.l.b16 %v183
    %v216 = vunpack.c.l.b16 %v184
    %v217 = vunpack.c.l.b16 %v185
    %v218 = vunpack.c.l.b16 %v186
    %v219 = vunpack.c.l.b16 %v187
    %v220 = vunpack.c.l.b16 %v188
    %v221 = vunpack.c.l.b16 %v189
    %v222 = vunpack.c.l.b16 %v190
    %v223 = vunpack.c.l.b16 %v191
    %v224 = vunpack.c.l.b16 %v192
    %v225 = vunpack.c.l.b16 %v193
    %v226 = vunpack.c.l.b16 %v194
    %v227 = vpack.c.b16 %v212, %v211
    %v228 = vpack.c.b16 %v214, %v213
    %v229 = vpack.c.b16 %v216, %v215
    %v230 = vpack.c.b16 %v218, %v217
    %v231 = vpack.c.b16 %v220, %v219
    %v232 = vpack.c.b16 %v222, %v221
    %v233 = vpack.c.b16 %v224, %v223
    %v234 = vpack.c.b16 %v226, %v225
    %vm235 = vcmask 64512
    %v237 = vsel %vm235, %v227, 0
    %v240 = vsel %vm235, %v228, 0
    %v243 = vsel %vm235, %v229, 0
    %v246 = vsel %vm235, %v230, 0
    %v249 = vsel %vm235, %v231, 0
    %v252 = vsel %vm235, %v232, 0
    %v255 = vsel %vm235, %v233, 0
    %v258 = vsel %vm235, %v234, 0
    %vm260 = vcmask 1043456
    %v262 = vsel %vm260, %v143, 0
    %264 = vmatpush.bf16.msra.mxu0 0
    %265 = vmatpush.bf16.msra.mxu0 0
    %266 = vmatpush.bf16.msra.mxu0 0
    %267 = vmatpush.bf16.msra.mxu0 0
    %268 = vmatpush.bf16.msra.mxu0 0
    %269 = vmatpush.bf16.msra.mxu0 0
    %270 = vmatpush.bf16.msra.mxu0 0
    %271 = vmatpush.bf16.msra.mxu0 %v262
    %272 = vmatmul.bf16.gmra.mxu0 %v237
    %v273 = vpop.f32.mrf.mxu0
    %v274 = vadd.f32 0.0, %v273
    %v275 = vpop.f32.mrf.mxu0
    %v276 = vadd.f32 0.0, %v275
    %277 = vmatmul.bf16.gmra.mxu0 %v240
    %v278 = vpop.f32.mrf.mxu0
    %v279 = vadd.f32 0.0, %v278
    %v280 = vpop.f32.mrf.mxu0
    %v281 = vadd.f32 0.0, %v280
    %282 = vmatmul.bf16.gmra.mxu0 %v243
    %v283 = vpop.f32.mrf.mxu0
    %v284 = vadd.f32 0.0, %v283
    %v285 = vpop.f32.mrf.mxu0
    %v286 = vadd.f32 0.0, %v285
    %287 = vmatmul.bf16.gmra.mxu0 %v246
    %v288 = vpop.f32.mrf.mxu0
    %v289 = vadd.f32 0.0, %v288
    %v290 = vpop.f32.mrf.mxu0
    %v291 = vadd.f32 0.0, %v290
    %292 = vmatmul.bf16.gmra.mxu0 %v249
    %v293 = vpop.f32.mrf.mxu0
    %v294 = vadd.f32 0.0, %v293
    %v295 = vpop.f32.mrf.mxu0
    %v296 = vadd.f32 0.0, %v295
    %297 = vmatmul.bf16.gmra.mxu0 %v252
    %v298 = vpop.f32.mrf.mxu0
    %v299 = vadd.f32 0.0, %v298
    %v300 = vpop.f32.mrf.mxu0
    %v301 = vadd.f32 0.0, %v300
    %302 = vmatmul.bf16.gmra.mxu0 %v255
    %v303 = vpop.f32.mrf.mxu0
    %v304 = vadd.f32 0.0, %v303
    %v305 = vpop.f32.mrf.mxu0
    %v306 = vadd.f32 0.0, %v305
    %307 = vmatmul.bf16.gmra.mxu0 %v258
    %v308 = vpop.f32.mrf.mxu0
    %v309 = vadd.f32 0.0, %v308
    %v310 = vpop.f32.mrf.mxu0
    %v311 = vadd.f32 0.0, %v310
    %312 = vdwg.mxu0
    %v313 = vpack.c.bf16 %v274, %v274
    %v314 = vpack.c.bf16 %v276, %v276
    %v315 = vpack.c.bf16 %v279, %v279
    %v316 = vpack.c.bf16 %v281, %v281
    %v317 = vpack.c.bf16 %v284, %v284
    %v318 = vpack.c.bf16 %v286, %v286
    %v319 = vpack.c.bf16 %v289, %v289
    %v320 = vpack.c.bf16 %v291, %v291
    %v321 = vpack.c.bf16 %v294, %v294
    %v322 = vpack.c.bf16 %v296, %v296
    %v323 = vpack.c.bf16 %v299, %v299
    %v324 = vpack.c.bf16 %v301, %v301
    %v325 = vpack.c.bf16 %v304, %v304
    %v326 = vpack.c.bf16 %v306, %v306
    %v327 = vpack.c.bf16 %v309, %v309
    %v328 = vpack.c.bf16 %v311, %v311
    %v329 = vld [vmem:[%s7] sm:$0xf]
    %v330 = vld [vmem:[%s7 + $0x4] sm:$0xf]
    %v331 = vld [vmem:[%s7 + $0x8] sm:$0xf]
    %v332 = vld [vmem:[%s7 + $0xc] sm:$0xf]
    %v333 = vld [vmem:[%s7 + $0x10] sm:$0xf]
    %v334 = vld [vmem:[%s7 + $0x14] sm:$0xf]
    %v335 = vld [vmem:[%s7 + $0x18] sm:$0xf]
    %v336 = vld [vmem:[%s7 + $0x1c] sm:$0xf]
    %v337 = vld [vmem:[%s7 + $0x20] sm:$0xf]
    %v338 = vld [vmem:[%s7 + $0x24] sm:$0xf]
    %v339 = vld [vmem:[%s7 + $0x28] sm:$0xf]
    %v340 = vld [vmem:[%s7 + $0x2c] sm:$0xf]
    %v341 = vld [vmem:[%s7 + $0x30] sm:$0xf]
    %v342 = vld [vmem:[%s7 + $0x34] sm:$0xf]
    %v343 = vld [vmem:[%s7 + $0x38] sm:$0xf]
    %v344 = vld [vmem:[%s7 + $0x3c] sm:$0xf]
    %v345 = vunpack.c.l.bf16 %v313
    %v346 = vunpack.c.l.bf16 %v314
    %v347 = vunpack.c.l.bf16 %v315
    %v348 = vunpack.c.l.bf16 %v316
    %v349 = vunpack.c.l.bf16 %v317
    %v350 = vunpack.c.l.bf16 %v318
    %v351 = vunpack.c.l.bf16 %v319
    %v352 = vunpack.c.l.bf16 %v320
    %v353 = vunpack.c.l.bf16 %v321
    %v354 = vunpack.c.l.bf16 %v322
    %v355 = vunpack.c.l.bf16 %v323
    %v356 = vunpack.c.l.bf16 %v324
    %v357 = vunpack.c.l.bf16 %v325
    %v358 = vunpack.c.l.bf16 %v326
    %v359 = vunpack.c.l.bf16 %v327
    %v360 = vunpack.c.l.bf16 %v328
    %v361 = vunpack.c.l.bf16 %v329
    %v362 = vunpack.c.l.bf16 %v330
    %v363 = vunpack.c.l.bf16 %v331
    %v364 = vunpack.c.l.bf16 %v332
    %v365 = vunpack.c.l.bf16 %v333
    %v366 = vunpack.c.l.bf16 %v334
    %v367 = vunpack.c.l.bf16 %v335
    %v368 = vunpack.c.l.bf16 %v336
    %v369 = vunpack.c.l.bf16 %v337
    %v370 = vunpack.c.l.bf16 %v338
    %v371 = vunpack.c.l.bf16 %v339
    %v372 = vunpack.c.l.bf16 %v340
    %v373 = vunpack.c.l.bf16 %v341
    %v374 = vunpack.c.l.bf16 %v342
    %v375 = vunpack.c.l.bf16 %v343
    %v376 = vunpack.c.l.bf16 %v344
    %v377 = vmul.f32 %v345, %v361
    %v378 = vmul.f32 %v346, %v362
    %v379 = vmul.f32 %v347, %v363
    %v380 = vmul.f32 %v348, %v364
    %v381 = vmul.f32 %v349, %v365
    %v382 = vmul.f32 %v350, %v366
    %v383 = vmul.f32 %v351, %v367
    %v384 = vmul.f32 %v352, %v368
    %v385 = vmul.f32 %v353, %v369
    %v386 = vmul.f32 %v354, %v370
    %v387 = vmul.f32 %v355, %v371
    %v388 = vmul.f32 %v356, %v372
    %v389 = vmul.f32 %v357, %v373
    %v390 = vmul.f32 %v358, %v374
    %v391 = vmul.f32 %v359, %v375
    %v392 = vmul.f32 %v360, %v376
    %v393 = vpack.c.bf16 %v378, %v377
    %v394 = vpack.c.bf16 %v380, %v379
    %v395 = vpack.c.bf16 %v382, %v381
    %v396 = vpack.c.bf16 %v384, %v383
    %v397 = vpack.c.bf16 %v386, %v385
    %v398 = vpack.c.bf16 %v388, %v387
    %v399 = vpack.c.bf16 %v390, %v389
    %v400 = vpack.c.bf16 %v392, %v391
    %401 = vmatpush.bf16.msra.mxu0 %v400
    %402 = vmatpush.bf16.msra.mxu0 %v399
    %403 = vmatpush.bf16.msra.mxu0 %v398
    %404 = vmatpush.bf16.msra.mxu0 %v397
    %405 = vmatpush.bf16.msra.mxu0 %v396
    %406 = vmatpush.bf16.msra.mxu0 %v395
    %407 = vmatpush.bf16.msra.mxu0 %v394
    %408 = vmatpush.bf16.msra.mxu0 %v393
    %409 = vmatmul.bf16.gmra.mxu0 %v178
    %v410 = vpop.f32.mrf.mxu0
    %v411 = vadd.f32 0.0, %v410
    %v412 = vpop.f32.mrf.mxu0
    %413 = vdwg.mxu0
    %v414 = vmul.f32 %v174, %v411
    %415 = vst.msk [vmem:[#allocation2] sm:$0xff] %vm56, %v414
    %v417 = vsel %vm260, %v144, 0
    %419 = vmatpush.bf16.msra.mxu0 0
    %420 = vmatpush.bf16.msra.mxu0 0
    %421 = vmatpush.bf16.msra.mxu0 0
    %422 = vmatpush.bf16.msra.mxu0 0
    %423 = vmatpush.bf16.msra.mxu0 0
    %424 = vmatpush.bf16.msra.mxu0 0
    %425 = vmatpush.bf16.msra.mxu0 0
    %426 = vmatpush.bf16.msra.mxu0 %v417
    %427 = vmatmul.bf16.gmra.mxu0 %v237
    %v428 = vpop.f32.mrf.mxu0
    %v429 = vadd.f32 0.0, %v428
    %v430 = vpop.f32.mrf.mxu0
    %v431 = vadd.f32 0.0, %v430
    %432 = vmatmul.bf16.gmra.mxu0 %v240
    %v433 = vpop.f32.mrf.mxu0
    %v434 = vadd.f32 0.0, %v433
    %v435 = vpop.f32.mrf.mxu0
    %v436 = vadd.f32 0.0, %v435
    %437 = vmatmul.bf16.gmra.mxu0 %v243
    %v438 = vpop.f32.mrf.mxu0
    %v439 = vadd.f32 0.0, %v438
    %v440 = vpop.f32.mrf.mxu0
    %v441 = vadd.f32 0.0, %v440
    %442 = vmatmul.bf16.gmra.mxu0 %v246
    %v443 = vpop.f32.mrf.mxu0
    %v444 = vadd.f32 0.0, %v443
    %v445 = vpop.f32.mrf.mxu0
    %v446 = vadd.f32 0.0, %v445
    %447 = vmatmul.bf16.gmra.mxu0 %v249
    %v448 = vpop.f32.mrf.mxu0
    %v449 = vadd.f32 0.0, %v448
    %v450 = vpop.f32.mrf.mxu0
    %v451 = vadd.f32 0.0, %v450
    %452 = vmatmul.bf16.gmra.mxu0 %v252
    %v453 = vpop.f32.mrf.mxu0
    %v454 = vadd.f32 0.0, %v453
    %v455 = vpop.f32.mrf.mxu0
    %v456 = vadd.f32 0.0, %v455
    %457 = vmatmul.bf16.gmra.mxu0 %v255
    %v458 = vpop.f32.mrf.mxu0
    %v459 = vadd.f32 0.0, %v458
    %v460 = vpop.f32.mrf.mxu0
    %v461 = vadd.f32 0.0, %v460
    %462 = vmatmul.bf16.gmra.mxu0 %v258
    %v463 = vpop.f32.mrf.mxu0
    %v464 = vadd.f32 0.0, %v463
    %v465 = vpop.f32.mrf.mxu0
    %v466 = vadd.f32 0.0, %v465
    %467 = vdwg.mxu0
    %v468 = vpack.c.bf16 %v429, %v429
    %v469 = vpack.c.bf16 %v431, %v431
    %v470 = vpack.c.bf16 %v434, %v434
    %v471 = vpack.c.bf16 %v436, %v436
    %v472 = vpack.c.bf16 %v439, %v439
    %v473 = vpack.c.bf16 %v441, %v441
    %v474 = vpack.c.bf16 %v444, %v444
    %v475 = vpack.c.bf16 %v446, %v446
    %v476 = vpack.c.bf16 %v449, %v449
    %v477 = vpack.c.bf16 %v451, %v451
    %v478 = vpack.c.bf16 %v454, %v454
    %v479 = vpack.c.bf16 %v456, %v456
    %v480 = vpack.c.bf16 %v459, %v459
    %v481 = vpack.c.bf16 %v461, %v461
    %v482 = vpack.c.bf16 %v464, %v464
    %v483 = vpack.c.bf16 %v466, %v466
    %v484 = vld [vmem:[%s7] sm:$0xf]
    %v485 = vld [vmem:[%s7 + $0x4] sm:$0xf]
    %v486 = vld [vmem:[%s7 + $0x8] sm:$0xf]
    %v487 = vld [vmem:[%s7 + $0xc] sm:$0xf]
    %v488 = vld [vmem:[%s7 + $0x10] sm:$0xf]
    %v489 = vld [vmem:[%s7 + $0x14] sm:$0xf]
    %v490 = vld [vmem:[%s7 + $0x18] sm:$0xf]
    %v491 = vld [vmem:[%s7 + $0x1c] sm:$0xf]
    %v492 = vld [vmem:[%s7 + $0x20] sm:$0xf]
    %v493 = vld [vmem:[%s7 + $0x24] sm:$0xf]
    %v494 = vld [vmem:[%s7 + $0x28] sm:$0xf]
    %v495 = vld [vmem:[%s7 + $0x2c] sm:$0xf]
    %v496 = vld [vmem:[%s7 + $0x30] sm:$0xf]
    %v497 = vld [vmem:[%s7 + $0x34] sm:$0xf]
    %v498 = vld [vmem:[%s7 + $0x38] sm:$0xf]
    %v499 = vld [vmem:[%s7 + $0x3c] sm:$0xf]
    %v500 = vunpack.c.l.bf16 %v468
    %v501 = vunpack.c.l.bf16 %v469
    %v502 = vunpack.c.l.bf16 %v470
    %v503 = vunpack.c.l.bf16 %v471
    %v504 = vunpack.c.l.bf16 %v472
    %v505 = vunpack.c.l.bf16 %v473
    %v506 = vunpack.c.l.bf16 %v474
    %v507 = vunpack.c.l.bf16 %v475
    %v508 = vunpack.c.l.bf16 %v476
    %v509 = vunpack.c.l.bf16 %v477
    %v510 = vunpack.c.l.bf16 %v478
    %v511 = vunpack.c.l.bf16 %v479
    %v512 = vunpack.c.l.bf16 %v480
    %v513 = vunpack.c.l.bf16 %v481
    %v514 = vunpack.c.l.bf16 %v482
    %v515 = vunpack.c.l.bf16 %v483
    %v516 = vunpack.c.l.bf16 %v484
    %v517 = vunpack.c.l.bf16 %v485
    %v518 = vunpack.c.l.bf16 %v486
    %v519 = vunpack.c.l.bf16 %v487
    %v520 = vunpack.c.l.bf16 %v488
    %v521 = vunpack.c.l.bf16 %v489
    %v522 = vunpack.c.l.bf16 %v490
    %v523 = vunpack.c.l.bf16 %v491
    %v524 = vunpack.c.l.bf16 %v492
    %v525 = vunpack.c.l.bf16 %v493
    %v526 = vunpack.c.l.bf16 %v494
    %v527 = vunpack.c.l.bf16 %v495
    %v528 = vunpack.c.l.bf16 %v496
    %v529 = vunpack.c.l.bf16 %v497
    %v530 = vunpack.c.l.bf16 %v498
    %v531 = vunpack.c.l.bf16 %v499
    %v532 = vmul.f32 %v500, %v516
    %v533 = vmul.f32 %v501, %v517
    %v534 = vmul.f32 %v502, %v518
    %v535 = vmul.f32 %v503, %v519
    %v536 = vmul.f32 %v504, %v520
    %v537 = vmul.f32 %v505, %v521
    %v538 = vmul.f32 %v506, %v522
    %v539 = vmul.f32 %v507, %v523
    %v540 = vmul.f32 %v508, %v524
    %v541 = vmul.f32 %v509, %v525
    %v542 = vmul.f32 %v510, %v526
    %v543 = vmul.f32 %v511, %v527
    %v544 = vmul.f32 %v512, %v528
    %v545 = vmul.f32 %v513, %v529
    %v546 = vmul.f32 %v514, %v530
    %v547 = vmul.f32 %v515, %v531
    %v548 = vpack.c.bf16 %v533, %v532
    %v549 = vpack.c.bf16 %v535, %v534
    %v550 = vpack.c.bf16 %v537, %v536
    %v551 = vpack.c.bf16 %v539, %v538
    %v552 = vpack.c.bf16 %v541, %v540
    %v553 = vpack.c.bf16 %v543, %v542
    %v554 = vpack.c.bf16 %v545, %v544
    %v555 = vpack.c.bf16 %v547, %v546
    %556 = vmatpush.bf16.msra.mxu0 %v555
    %557 = vmatpush.bf16.msra.mxu0 %v554
    %558 = vmatpush.bf16.msra.mxu0 %v553
    %559 = vmatpush.bf16.msra.mxu0 %v552
    %560 = vmatpush.bf16.msra.mxu0 %v551
    %561 = vmatpush.bf16.msra.mxu0 %v550
    %562 = vmatpush.bf16.msra.mxu0 %v549
    %563 = vmatpush.bf16.msra.mxu0 %v548
    %564 = vmatmul.bf16.gmra.mxu0 %v178
    %v565 = vpop.f32.mrf.mxu0
    %v566 = vadd.f32 0.0, %v565
    %v567 = vpop.f32.mrf.mxu0
    %568 = vdwg.mxu0
    %v569 = vmul.f32 %v176, %v566
    %570 = vst.msk [vmem:[#allocation2 + $0x8] sm:$0xff] %vm56, %v569
    %v571 = vld [vmem:[#allocation2] sm:$0xff]
    %v572 = vld [vmem:[#allocation2 + $0x8] sm:$0xff]
    %v573 = vpack.c.bf16 %v572, %v571
    %v574 = vld [vmem:[%s3] sm:$0xf]
    %v575 = vld [vmem:[%s3 + $0x4] sm:$0xf]
    %v576 = vld [vmem:[%s3 + $0x8] sm:$0xf]
    %v577 = vld [vmem:[%s3 + $0xc] sm:$0xf]
    %v582 = vunpack.c.l.b16 %v574
    %v583 = vunpack.c.l.b16 %v575
    %v584 = vunpack.c.l.b16 %v576
    %v585 = vunpack.c.l.b16 %v577
    %v586 = vpack.c.b16 %v583, %v582
    %v587 = vpack.c.b16 %v585, %v584
    %v591 = vsel %vm56, %v573, 0
    %593 = vmatpush.bf16.msra.mxu0 0
    %594 = vmatpush.bf16.msra.mxu0 0
    %595 = vmatpush.bf16.msra.mxu0 0
    %596 = vmatpush.bf16.msra.mxu0 0
    %597 = vmatpush.bf16.msra.mxu0 0
    %598 = vmatpush.bf16.msra.mxu0 0
    %599 = vmatpush.bf16.msra.mxu0 %v587
    %600 = vmatpush.bf16.msra.mxu0 %v586
    %601 = vmatmul.bf16.gmra.mxu0 %v591
    %v602 = vpop.f32.mrf.mxu0
    %v603 = vadd.f32 0.0, %v602
    %v604 = vpop.f32.mrf.mxu0
    %v605 = vadd.f32 0.0, %v604
    %606 = vdwg.mxu0
    %v607 = vsel %vm56, %v603, 0.0
    %608 = vadd.xlane.f32.xlu0 %v607
    %v609 = vpop.xlane.xlu0 %608
    %v610 = vsel %vm56, %v605, 0.0
    %611 = vadd.xlane.f32.xlu0 %v610
    %v612 = vpop.xlane.xlu0 %611
    %v613 = vrcp.pop 32.0
    %v614 = vmul.f32 32.0, %v613
    %v615 = vsub.f32 1.0, %v614
    %v616 = vmul.f32 %v613, %v615
    %v617 = vadd.f32 %v613, %v616
    %vm618 = vweird.f32 %v613
    %v619 = vsel %vm618, %v613, %v617
    %v620 = vmul.f32 %v609, %v619
    %v621 = vmul.f32 %v612, %v619
    %v622 = vmul.f32 %v603, %v603
    %v623 = vmul.f32 %v605, %v605
    %v624 = vsel %vm56, %v622, 0.0
    %625 = vadd.xlane.f32.xlu0 %v624
    %v626 = vpop.xlane.xlu0 %625
    %v627 = vsel %vm56, %v623, 0.0
    %628 = vadd.xlane.f32.xlu0 %v627
    %v629 = vpop.xlane.xlu0 %628
    %v630 = vmul.f32 %v626, %v619
    %v631 = vmul.f32 %v629, %v619
    %v632 = vmul.f32 %v620, %v620
    %v633 = vmul.f32 %v621, %v621
    %v634 = vsub.f32 %v630, %v632
    %v635 = vsub.f32 %v631, %v633
    %v636 = vsub.f32 %v603, %v620
    %v637 = vsub.f32 %v605, %v621
    %v638 = vadd.f32 %v634, 1e-05
    %v639 = vadd.f32 %v635, 1e-05
    %v640 = vrsqrt.pop %v638
    %v641 = vmul.f32 %v640, %v638
    %v642 = vmul.f32 %v641, %v640
    %v643 = vmul.f32 0.5, %v642
    %v644 = vsub.f32 1.5, %v643
    %v645 = vmul.f32 %v640, %v644
    %vm646 = vweird.f32 %v638
    %vm647 = vweird.f32 %v640
    %vm648 = vmor %vm646, %vm647
    %v649 = vsel %vm648, %v640, %v645
    %v650 = vrsqrt.pop %v639
    %v651 = vmul.f32 %v650, %v639
    %v652 = vmul.f32 %v651, %v650
    %v653 = vmul.f32 0.5, %v652
    %v654 = vsub.f32 1.5, %v653
    %v655 = vmul.f32 %v650, %v654
    %vm656 = vweird.f32 %v639
    %vm657 = vweird.f32 %v650
    %vm658 = vmor %vm656, %vm657
    %v659 = vsel %vm658, %v650, %v655
    %v660 = vmul.f32 %v636, %v649
    %v661 = vmul.f32 %v637, %v659
    %v662 = vld [vmem:[%s8] sm:$0x1]
    %v664 = vperm.slane %v662, 0
    %v666 = vmul.f32 %v660, %v664
    %v667 = vmul.f32 %v661, %v664
    %v668 = vld [vmem:[%s9] sm:$0x1]
    %v670 = vperm.slane %v668, 0
    %v672 = vadd.f32 %v666, %v670
    %v673 = vadd.f32 %v667, %v670
    %674 = vst.msk [vmem:[#allocation3] sm:$0xff] %vm56, %v672
    %675 = vst.msk [vmem:[#allocation3 + $0x8] sm:$0xff] %vm56, %v673
    // Predicated region
    $region42: #{tpu_custom_call.1} parent=1 // pred_check
      _
    $region43: #{tpu_custom_call.1} parent=1 // pred_check_branch
      %677 = sbr.rel (0) target = $region45
    $region44: #{tpu_custom_call.1} parent=1 // pred_region
      %679 = vsyncadd [#allocation4], 0
      %s680 = sshll.u32 [#allocation3], 4
      %s681 = int_to_ptr.vmem [resolvable:$true] %s680
      %s682 = sshll.u32 %s10, 4
      %s683 = int_to_ptr.hbm [resolvable:$true] %s682
      %688 = dma.vmem_to_hbm [thread:$0]  %s681, 256, %s683, [#allocation4], 128, 128, 8
    $region45: #{tpu_custom_call.1} parent=1 // pred_fallthru
      _
    // Predicated region
    $region46: #{tpu_custom_call.1} parent=1 // pred_check
      _
    $region47: #{tpu_custom_call.1} parent=1 // pred_check_branch
      %690 = sbr.rel (0) target = $region49
    $region48: #{tpu_custom_call.1} parent=1 // pred_region
      %692 = dma.done [#allocation4], 256
    $region49: #{tpu_custom_call.1} parent=1 // pred_fallthru
      _
    %693 = vsyncpa [#allocation4], 1

</llo_original>
